<compile_context>
chip_gen: v6e
topology: v6e:2x2x1
jax: 0.10.0
libtpu: 0.0.40
codegen_flags: <defaults>
</compile_context>

<pallas_src>
import jax
import jax.numpy as jnp
from jax import lax
from jax.experimental import pallas as pl
from jax.experimental.pallas import tpu as pltpu


def encoder_flows_kernel(flow_ref, flow_t_ref, w1_ref, b1_ref, w2_ref, b2_ref,
                         w3_ref, b3_ref, out_ref):
    """One batch element: GCN normalization + three fused GCNConv layers."""
    x = flow_ref[...]        # (N, N)  node features == flow rows
    xt = flow_t_ref[...]     # (N, N)  flow transposed (wrapper-provided)
    n = x.shape[0]

    row = lax.broadcasted_iota(jnp.int32, (n, n), 0)
    col = lax.broadcasted_iota(jnp.int32, (n, n), 1)
    eye = row == col

    # \hat A: keep existing self-loop weights, add weight-1 self-loops where the
    # diagonal is zero (matches add_remaining_self_loops with fill_value=1).
    a_hat = jnp.where(eye & (x == 0.0), 1.0, x)        # (N, N)  \hat A
    a_hat_t = jnp.where(eye & (xt == 0.0), 1.0, xt)    # (N, N)  \hat A^T

    # Node degrees (column sums of \hat A) in both layouts -> no transposes.
    deg_row = jnp.sum(a_hat, axis=0, keepdims=True)    # (1, N): deg[j]
    deg_col = jnp.sum(a_hat_t, axis=1, keepdims=True)  # (N, 1): deg[j]
    dinv_row = jnp.where(deg_row > 0.0, lax.rsqrt(deg_row), 0.0)
    dinv_col = jnp.where(deg_col > 0.0, lax.rsqrt(deg_col), 0.0)

    # S^T = D^{-1/2} \hat A^T D^{-1/2}, built purely with broadcasts.
    st = a_hat_t * dinv_col * dinv_row                 # (N, N)

    def gcn(h, w_ref, b_ref):
        y = jnp.dot(h, w_ref[...], preferred_element_type=jnp.float32)   # X W
        return jnp.dot(st, y, preferred_element_type=jnp.float32) + b_ref[...]

    h1 = gcn(x, w1_ref, b1_ref)    # (N, rnn_size)
    h2 = gcn(h1, w2_ref, b2_ref)   # (N, intermediate_size)
    h3 = gcn(h2, w3_ref, b3_ref)   # (N, rnn_size)
    out_ref[...] = h3


def encoder_flows_forward(params, flows):
    """Equivalent of Encoder_Flows.forward. flows: (B, N, N) -> (B, N, rnn_size)."""
    w1, b1, w2, b2, w3, b3 = params
    flows = flows.astype(jnp.float32)
    B, N, _ = flows.shape
    R = w3.shape[1]
    flows_t = jnp.swapaxes(flows, 1, 2)   # single cheap transpose in the wrapper

    def full_block(a):
        nd = a.ndim
        return pl.BlockSpec(a.shape, lambda b, _nd=nd: (0,) * _nd)

    return pl.pallas_call(
        encoder_flows_kernel,
        out_shape=jax.ShapeDtypeStruct((B, N, R), jnp.float32),
        grid=(B,),
        in_specs=[
            pl.BlockSpec((None, N, N), lambda b: (b, 0, 0)),   # flow[b]
            pl.BlockSpec((None, N, N), lambda b: (b, 0, 0)),   # flow[b]^T
            full_block(w1), full_block(b1),
            full_block(w2), full_block(b2),
            full_block(w3), full_block(b3),
        ],
        out_specs=pl.BlockSpec((None, N, R), lambda b: (b, 0, 0)),
        compiler_params=pltpu.CompilerParams(
            dimension_semantics=("parallel",)),
    )(flows, flows_t, w1, b1, w2, b2, w3, b3)


def init_params(key, size, intermediate_size, rnn_size):
    """Deterministic synthetic init (glorot weights, small uniform biases)."""
    def glorot(k, fan_in, fan_out):
        limit = jnp.sqrt(6.0 / (fan_in + fan_out))
        return jax.random.uniform(k, (fan_in, fan_out), jnp.float32, -limit, limit)

    ks = jax.random.split(key, 6)
    w1 = glorot(ks[0], size, rnn_size)
    w2 = glorot(ks[1], rnn_size, intermediate_size)
    w3 = glorot(ks[2], intermediate_size, rnn_size)
    b1 = jax.random.uniform(ks[3], (1, rnn_size), jnp.float32, -0.1, 0.1)
    b2 = jax.random.uniform(ks[4], (1, intermediate_size), jnp.float32, -0.1, 0.1)
    b3 = jax.random.uniform(ks[5], (1, rnn_size), jnp.float32, -0.1, 0.1)
    return (w1, b1, w2, b2, w3, b3)


def _reference_forward(params, flows):
    """Pure-JAX dense reference mirroring torch_geometric GCNConv semantics."""
    w1, b1, w2, b2, w3, b3 = params
    B = flows.shape[0]
    outs = []
    for i in range(B):
        f = flows[i].astype(jnp.float32)
        d = jnp.diag(f)
        a_hat = f + jnp.diag(jnp.where(d == 0.0, 1.0, 0.0))
        deg = a_hat.sum(axis=0)
        dinv = jnp.where(deg > 0.0, deg ** -0.5, 0.0)
        s = dinv[:, None] * a_hat * dinv[None, :]
        h = f
        for w, b in ((w1, b1), (w2, b2), (w3, b3)):
            h = s.T @ (h @ w) + b
        outs.append(h)
    return jnp.stack(outs)


if __name__ == "__main__":
    size = 16                # number of graph nodes (flow matrix is size x size)
    intermediate_size = 32
    rnn_size = 32
    batch = 2

    key = jax.random.PRNGKey(0)
    kp, kf, km = jax.random.split(key, 3)

    params = init_params(kp, size, intermediate_size, rnn_size)

    # Sparse-ish nonnegative flow matrices (some exact zeros, including on the
    # diagonal, to exercise the self-loop fill path).
    u = jax.random.uniform(kf, (batch, size, size), jnp.float32)
    m = jax.random.uniform(km, (batch, size, size), jnp.float32)
    flows = jnp.where(m < 0.4, 0.0, u)

    out = encoder_flows_forward(params, flows)
    out = jax.block_until_ready(out)

    ref = _reference_forward(params, flows)
    assert out.shape == (batch, size, rnn_size), out.shape
    assert jnp.allclose(out, ref, atol=2e-3, rtol=2e-3), "mismatch vs reference"

    print("KERNEL_OK")
</pallas_src>

<mosaic_0001>
module attributes {stable_mosaic.version = 11 : i64} {
  func.func @encoder_flows_kernel(%arg0: i32, %arg1: memref<1x16x16xf32, #tpu.memory_space<vmem>>, %arg2: memref<1x16x16xf32, #tpu.memory_space<vmem>>, %arg3: memref<16x32xf32, #tpu.memory_space<vmem>>, %arg4: memref<1x32xf32, #tpu.memory_space<vmem>>, %arg5: memref<32x32xf32, #tpu.memory_space<vmem>>, %arg6: memref<1x32xf32, #tpu.memory_space<vmem>>, %arg7: memref<32x32xf32, #tpu.memory_space<vmem>>, %arg8: memref<1x32xf32, #tpu.memory_space<vmem>>, %arg9: memref<1x16x32xf32, #tpu.memory_space<vmem>>) attributes {dimension_semantics = [#tpu.dimension_semantics<parallel>], iteration_bounds = array<i64: 2>, scalar_prefetch = 0 : i64, scratch_operands = 0 : i64, tpu.core_type = #tpu.core_type<tc>, window_params = [{transform_indices = @transform_0, window_bounds = array<i64: 1, 16, 16>}, {transform_indices = @transform_1, window_bounds = array<i64: 1, 16, 16>}, {pipeline_mode = #tpu.pipeline_mode<synchronous>, transform_indices = @transform_2, window_bounds = array<i64: 16, 32>}, {pipeline_mode = #tpu.pipeline_mode<synchronous>, transform_indices = @transform_3, window_bounds = array<i64: 1, 32>}, {pipeline_mode = #tpu.pipeline_mode<synchronous>, transform_indices = @transform_4, window_bounds = array<i64: 32, 32>}, {pipeline_mode = #tpu.pipeline_mode<synchronous>, transform_indices = @transform_5, window_bounds = array<i64: 1, 32>}, {pipeline_mode = #tpu.pipeline_mode<synchronous>, transform_indices = @transform_6, window_bounds = array<i64: 32, 32>}, {pipeline_mode = #tpu.pipeline_mode<synchronous>, transform_indices = @transform_7, window_bounds = array<i64: 1, 32>}, {transform_indices = @transform_8, window_bounds = array<i64: 1, 16, 32>}]} {
    %c0 = arith.constant 0 : index
    %c0_0 = arith.constant 0 : index
    %c0_1 = arith.constant 0 : index
    %0 = vector.load %arg1[%c0, %c0_0, %c0_1] : memref<1x16x16xf32, #tpu.memory_space<vmem>>, vector<1x16x16xf32>
    %1 = vector.shape_cast %0 : vector<1x16x16xf32> to vector<16x16xf32>
    %c0_2 = arith.constant 0 : index
    %c0_3 = arith.constant 0 : index
    %c0_4 = arith.constant 0 : index
    %2 = vector.load %arg2[%c0_2, %c0_3, %c0_4] : memref<1x16x16xf32, #tpu.memory_space<vmem>>, vector<1x16x16xf32>
    %3 = vector.shape_cast %2 : vector<1x16x16xf32> to vector<16x16xf32>
    %4 = tpu.iota {dimensions = array<i32: 0>} : vector<16x16xi32>
    %5 = tpu.iota {dimensions = array<i32: 1>} : vector<16x16xi32>
    %6 = arith.cmpi eq, %4, %5 : vector<16x16xi32>
    %cst = arith.constant 0.000000e+00 : f32
    %7 = vector.broadcast %cst : f32 to vector<16x16xf32>
    %8 = arith.cmpf oeq, %1, %7 : vector<16x16xf32>
    %9 = arith.andi %6, %8 : vector<16x16xi1>
    %cst_5 = arith.constant 1.000000e+00 : f32
    %10 = vector.broadcast %cst_5 : f32 to vector<16x16xf32>
    %11 = arith.select %9, %10, %1 : vector<16x16xi1>, vector<16x16xf32>
    %cst_6 = arith.constant 0.000000e+00 : f32
    %12 = vector.broadcast %cst_6 : f32 to vector<16x16xf32>
    %13 = arith.cmpf oeq, %3, %12 : vector<16x16xf32>
    %14 = arith.andi %6, %13 : vector<16x16xi1>
    %cst_7 = arith.constant 1.000000e+00 : f32
    %15 = vector.broadcast %cst_7 : f32 to vector<16x16xf32>
    %16 = arith.select %14, %15, %3 : vector<16x16xi1>, vector<16x16xf32>
    %cst_8 = arith.constant dense<0.000000e+00> : vector<16xf32>
    %17 = vector.multi_reduction <add>, %11, %cst_8 [0] : vector<16x16xf32> to vector<16xf32>
    %18 = vector.shape_cast %17 : vector<16xf32> to vector<1x16xf32>
    %cst_9 = arith.constant dense<0.000000e+00> : vector<16xf32>
    %19 = vector.multi_reduction <add>, %16, %cst_9 [1] : vector<16x16xf32> to vector<16xf32>
    %20 = vector.shape_cast %19 : vector<16xf32> to vector<16x1xf32>
    %cst_10 = arith.constant 0.000000e+00 : f32
    %21 = vector.broadcast %cst_10 : f32 to vector<1x16xf32>
    %22 = arith.cmpf ogt, %18, %21 : vector<1x16xf32>
    %23 = math.rsqrt %18 : vector<1x16xf32>
    %cst_11 = arith.constant 0.000000e+00 : f32
    %24 = vector.broadcast %cst_11 : f32 to vector<1x16xf32>
    %25 = arith.select %22, %23, %24 : vector<1x16xi1>, vector<1x16xf32>
    %cst_12 = arith.constant 0.000000e+00 : f32
    %26 = vector.broadcast %cst_12 : f32 to vector<16x1xf32>
    %27 = arith.cmpf ogt, %20, %26 : vector<16x1xf32>
    %28 = math.rsqrt %20 : vector<16x1xf32>
    %cst_13 = arith.constant 0.000000e+00 : f32
    %29 = vector.broadcast %cst_13 : f32 to vector<16x1xf32>
    %30 = arith.select %27, %28, %29 : vector<16x1xi1>, vector<16x1xf32>
    %31 = vector.broadcast %30 : vector<16x1xf32> to vector<16x16xf32>
    %32 = arith.mulf %16, %31 : vector<16x16xf32>
    %33 = vector.broadcast %25 : vector<1x16xf32> to vector<16x16xf32>
    %34 = arith.mulf %32, %33 : vector<16x16xf32>
    %c0_14 = arith.constant 0 : index
    %c0_15 = arith.constant 0 : index
    %35 = vector.load %arg3[%c0_14, %c0_15] : memref<16x32xf32, #tpu.memory_space<vmem>>, vector<16x32xf32>
    %cst_16 = arith.constant dense<0.000000e+00> : vector<16x32xf32>
    %36 = tpu.matmul %1, %35, %cst_16 {dimension_numbers = #tpu.dot_dimension_numbers<[1], [0], [0], [1], [0, 0, 1, 1], [], []>} : vector<16x16xf32>, vector<16x32xf32>, vector<16x32xf32> -> vector<16x32xf32>
    %cst_17 = arith.constant dense<0.000000e+00> : vector<16x32xf32>
    %37 = tpu.matmul %34, %36, %cst_17 {dimension_numbers = #tpu.dot_dimension_numbers<[1], [0], [0], [1], [0, 0, 1, 1], [], []>} : vector<16x16xf32>, vector<16x32xf32>, vector<16x32xf32> -> vector<16x32xf32>
    %c0_18 = arith.constant 0 : index
    %c0_19 = arith.constant 0 : index
    %38 = vector.load %arg4[%c0_18, %c0_19] : memref<1x32xf32, #tpu.memory_space<vmem>>, vector<1x32xf32>
    %39 = vector.broadcast %38 : vector<1x32xf32> to vector<16x32xf32>
    %40 = arith.addf %37, %39 : vector<16x32xf32>
    %c0_20 = arith.constant 0 : index
    %c0_21 = arith.constant 0 : index
    %41 = vector.load %arg5[%c0_20, %c0_21] : memref<32x32xf32, #tpu.memory_space<vmem>>, vector<32x32xf32>
    %cst_22 = arith.constant dense<0.000000e+00> : vector<16x32xf32>
    %42 = tpu.matmul %40, %41, %cst_22 {dimension_numbers = #tpu.dot_dimension_numbers<[1], [0], [0], [1], [0, 0, 1, 1], [], []>} : vector<16x32xf32>, vector<32x32xf32>, vector<16x32xf32> -> vector<16x32xf32>
    %cst_23 = arith.constant dense<0.000000e+00> : vector<16x32xf32>
    %43 = tpu.matmul %34, %42, %cst_23 {dimension_numbers = #tpu.dot_dimension_numbers<[1], [0], [0], [1], [0, 0, 1, 1], [], []>} : vector<16x16xf32>, vector<16x32xf32>, vector<16x32xf32> -> vector<16x32xf32>
    %c0_24 = arith.constant 0 : index
    %c0_25 = arith.constant 0 : index
    %44 = vector.load %arg6[%c0_24, %c0_25] : memref<1x32xf32, #tpu.memory_space<vmem>>, vector<1x32xf32>
    %45 = vector.broadcast %44 : vector<1x32xf32> to vector<16x32xf32>
    %46 = arith.addf %43, %45 : vector<16x32xf32>
    %c0_26 = arith.constant 0 : index
    %c0_27 = arith.constant 0 : index
    %47 = vector.load %arg7[%c0_26, %c0_27] : memref<32x32xf32, #tpu.memory_space<vmem>>, vector<32x32xf32>
    %cst_28 = arith.constant dense<0.000000e+00> : vector<16x32xf32>
    %48 = tpu.matmul %46, %47, %cst_28 {dimension_numbers = #tpu.dot_dimension_numbers<[1], [0], [0], [1], [0, 0, 1, 1], [], []>} : vector<16x32xf32>, vector<32x32xf32>, vector<16x32xf32> -> vector<16x32xf32>
    %cst_29 = arith.constant dense<0.000000e+00> : vector<16x32xf32>
    %49 = tpu.matmul %34, %48, %cst_29 {dimension_numbers = #tpu.dot_dimension_numbers<[1], [0], [0], [1], [0, 0, 1, 1], [], []>} : vector<16x16xf32>, vector<16x32xf32>, vector<16x32xf32> -> vector<16x32xf32>
    %c0_30 = arith.constant 0 : index
    %c0_31 = arith.constant 0 : index
    %50 = vector.load %arg8[%c0_30, %c0_31] : memref<1x32xf32, #tpu.memory_space<vmem>>, vector<1x32xf32>
    %51 = vector.broadcast %50 : vector<1x32xf32> to vector<16x32xf32>
    %52 = arith.addf %49, %51 : vector<16x32xf32>
    %c0_32 = arith.constant 0 : index
    %c0_33 = arith.constant 0 : index
    %c0_34 = arith.constant 0 : index
    %53 = vector.load %arg9[%c0_32, %c0_33, %c0_34] : memref<1x16x32xf32, #tpu.memory_space<vmem>>, vector<1x16x32xf32>
    %54 = vector.shape_cast %53 : vector<1x16x32xf32> to vector<16x32xf32>
    %55 = vector.shape_cast %52 : vector<16x32xf32> to vector<1x16x32xf32>
    tpu.vector_store %arg9[%c0_32, %c0_33, %c0_34], %55 {strides = array<i32>} : memref<1x16x32xf32, #tpu.memory_space<vmem>>, vector<1x16x32xf32>,
    return
  }
  func.func @transform_0(%arg0: i32) -> (i32, i32, i32) {
    %c0_i32 = arith.constant 0 : i32
    %c0_i32_0 = arith.constant 0 : i32
    %c0_i32_1 = arith.constant 0 : i32
    return %arg0, %c0_i32, %c0_i32_0 : i32, i32, i32
  }
  func.func @transform_1(%arg0: i32) -> (i32, i32, i32) {
    %c0_i32 = arith.constant 0 : i32
    %c0_i32_0 = arith.constant 0 : i32
    %c0_i32_1 = arith.constant 0 : i32
    return %arg0, %c0_i32, %c0_i32_0 : i32, i32, i32
  }
  func.func @transform_2(%arg0: i32) -> (i32, i32) {
    %c0_i32 = arith.constant 0 : i32
    %c0_i32_0 = arith.constant 0 : i32
    %c0_i32_1 = arith.constant 0 : i32
    return %c0_i32, %c0_i32_0 : i32, i32
  }
  func.func @transform_3(%arg0: i32) -> (i32, i32) {
    %c0_i32 = arith.constant 0 : i32
    %c0_i32_0 = arith.constant 0 : i32
    %c0_i32_1 = arith.constant 0 : i32
    return %c0_i32, %c0_i32_0 : i32, i32
  }
  func.func @transform_4(%arg0: i32) -> (i32, i32) {
    %c0_i32 = arith.constant 0 : i32
    %c0_i32_0 = arith.constant 0 : i32
    %c0_i32_1 = arith.constant 0 : i32
    return %c0_i32, %c0_i32_0 : i32, i32
  }
  func.func @transform_5(%arg0: i32) -> (i32, i32) {
    %c0_i32 = arith.constant 0 : i32
    %c0_i32_0 = arith.constant 0 : i32
    %c0_i32_1 = arith.constant 0 : i32
    return %c0_i32, %c0_i32_0 : i32, i32
  }
  func.func @transform_6(%arg0: i32) -> (i32, i32) {
    %c0_i32 = arith.constant 0 : i32
    %c0_i32_0 = arith.constant 0 : i32
    %c0_i32_1 = arith.constant 0 : i32
    return %c0_i32, %c0_i32_0 : i32, i32
  }
  func.func @transform_7(%arg0: i32) -> (i32, i32) {
    %c0_i32 = arith.constant 0 : i32
    %c0_i32_0 = arith.constant 0 : i32
    %c0_i32_1 = arith.constant 0 : i32
    return %c0_i32, %c0_i32_0 : i32, i32
  }
  func.func @transform_8(%arg0: i32) -> (i32, i32, i32) {
    %c0_i32 = arith.constant 0 : i32
    %c0_i32_0 = arith.constant 0 : i32
    %c0_i32_1 = arith.constant 0 : i32
    return %arg0, %c0_i32, %c0_i32_0 : i32, i32, i32
  }
}

</mosaic_0001>

<llo_original>
// kernel: tpu_custom_call.1
$region0: #{tpu_custom_call.1}
  #allocation0 [shape = 'u32[]', space=smem, size = 0x4, offset = 0x4, fixed_abs, tag = 'smem constant byte address 0x4 - core index']
  #allocation1 [shape = 'u32[144,128]{1,0:T(1,128)}', space=vmem, size = 0x12000, scoped, tag = 'internal scratch']
  %s0 = inlined_call_operand.hbm [shape: f32[2,16,16], index: 0, kind: input, shape index: {}]
  %s1 = inlined_call_operand.hbm [shape: f32[2,16,16], index: 1, kind: input, shape index: {}]
  %s2 = inlined_call_operand.hbm [shape: f32[16,32], index: 2, kind: input, shape index: {}]
  %s3 = inlined_call_operand.vmem [shape: f32[1,32], index: 3, kind: input, shape index: {}]
  %s4 = inlined_call_operand.hbm [shape: f32[32,32], index: 4, kind: input, shape index: {}]
  %s5 = inlined_call_operand.vmem [shape: f32[1,32], index: 5, kind: input, shape index: {}]
  %s6 = inlined_call_operand.hbm [shape: f32[32,32], index: 6, kind: input, shape index: {}]
  %s7 = inlined_call_operand.vmem [shape: f32[1,32], index: 7, kind: input, shape index: {}]
  %s8 = inlined_call_operand.hbm [shape: f32[2,16,32], index: 8, kind: output, shape index: {}]
  %s9 = sld [smem:[#allocation0]]
  $region85: #{tpu_custom_call.1} parent=0
    _
  %s11 = ssub.s32 1, %s9
  %s12 = scalar_select 0, %s11, %s9
  $region1: #{tpu_custom_call.1} parent=0
    #allocation2 [shape = 'u8[16384]{0}', space=vmem, size = 0x4000, scoped, tag = 'input window, operand 0']
    #allocation3 [shape = 's32[2]{0}', space=sflag, size = 0x8, scoped, tag = 'scoped memory for tpu_custom_call.1']
    #allocation4 [shape = 's32[2]{0}', space=sflag, size = 0x8, scoped, tag = 'scoped memory for tpu_custom_call.1']
    #allocation5 [shape = 'u8[16384]{0}', space=vmem, size = 0x4000, scoped, tag = 'input window, operand 1']
    #allocation6 [shape = 's32[2]{0}', space=sflag, size = 0x8, scoped, tag = 'scoped memory for tpu_custom_call.1']
    #allocation7 [shape = 'u8[8192]{0}', space=vmem, size = 0x2000, scoped, tag = 'input window, operand 2, single buffered']
    #allocation8 [shape = 'u8[16384]{0}', space=vmem, size = 0x4000, scoped, tag = 'input window, operand 4, single buffered']
    #allocation9 [shape = 's32[1]{0}', space=sflag, size = 0x4, scoped, tag = 'scoped memory for tpu_custom_call.1']
    #allocation10 [shape = 'u8[16384]{0}', space=vmem, size = 0x4000, scoped, tag = 'input window, operand 6, single buffered']
    #allocation11 [shape = 'u8[16384]{0}', space=vmem, size = 0x4000, scoped, tag = 'output window, operand 0']
    %13 = vsyncpa [#allocation3], 0
    %s14 = scalar_lea.sflag [#allocation3], 1
    %15 = vsyncpa %s14, 0
    %16 = vsyncpa [#allocation6], 0
    %s17 = scalar_lea.sflag [#allocation6], 1
    %18 = vsyncpa %s17, 0
    %19 = vsyncpa [#allocation9], 0
    %20 = vsyncpa [#allocation4], 0
    %s21 = scalar_lea.sflag [#allocation4], 1
    %22 = vsyncpa %s21, 0
    loop: start=0, step=1, limit=4
    $region2: #{tpu_custom_call.1} parent=1 // loop_pre_header
      _
    $region3: #{tpu_custom_call.1} parent=1 // loop_header
      %s24 = sphi 0, %s28
      %p25 = scmp.ge.s32.totalorder %s24, 4
      %s34 = sphi 0, %s36
      %s37 = sphi 0, %s34
      %s38 = sphi 0, %s37
      %s54 = sphi 0, %s38
      %s60 = sphi 0, %s62
      %s63 = sphi 0, %s60
      %s64 = sphi 0, %s63
      %s80 = sphi 0, %s64
      %s84 = sphi 0, %s84
      %s86 = sphi 0, %s84
      %s87 = sphi 0, %s86
      %s101 = sphi 0, %s87
      %s105 = sphi 0, %s105
      %s107 = sphi 0, %s105
      %s108 = sphi 0, %s107
      %s122 = sphi 0, %s108
      %s126 = sphi 0, %s126
      %s128 = sphi 0, %s126
      %s129 = sphi 0, %s128
      %s143 = sphi 0, %s129
      %s147 = sphi 0, %s147
      %s149 = sphi 0, %s147
      %s150 = sphi 0, %s149
      %s164 = sphi 0, %s150
      %s168 = sphi 0, %s168
      %s170 = sphi 0, %s168
      %s171 = sphi 0, %s170
      %s185 = sphi 0, %s171
      %s189 = sphi 0, %s189
      %s191 = sphi 0, %s189
      %s192 = sphi 0, %s191
      %s206 = sphi 0, %s192
      %s212 = sphi 0, %s214
      %s215 = sphi 0, %s212
      %s216 = sphi 0, %s215
      %s232 = sphi 0, %s216
    $region4: #{tpu_custom_call.1} parent=1 // loop_header_branch
      %27 = sbr.rel (%p25) target = $region8
    $region5: #{tpu_custom_call.1} parent=1 // loop_body
      %s29 = ssub.s32 %s24, 1
      %s30 = ssub.s32 %s24, 2
      %s31 = sadd.s32 %s24, 1
      %s32 = ssub.s32 %s24, %s31
      %p33 = scmp.eq.s32.totalorder %s32, 0
      %s35 = sadd.s32 %s34, 1
      %s36 = scalar_select %p33, %s34, %s35
      %p39 = pneg %p33
      %p40 = scmp.eq.s32.totalorder %s24, 1
      %p41 = por %p39, %p40
      %p42 = scmp.ne.s32.totalorder %s34, %s37
      %p43 = scmp.eq.s32.totalorder %s24, 0
      %p44 = por %p42, %p43
      %p45 = scmp.ne.s32.totalorder %s34, %s37
      %p46 = scmp.eq.s32.totalorder %s29, 1
      %p47 = por %p45, %p46
      %p48 = scmp.ne.s32.totalorder %s37, %s38
      %p49 = scmp.eq.s32.totalorder %s29, 0
      %p50 = por %p48, %p49
      %p51 = scmp.ne.s32.totalorder %s37, %s38
      %p52 = scmp.eq.s32.totalorder %s30, 1
      %p53 = por %p51, %p52
      %p55 = scmp.ne.s32.totalorder %s38, %s54
      %p56 = scmp.eq.s32.totalorder %s30, 0
      %p57 = por %p55, %p56
      %s58 = ssub.s32 %s24, %s31
      %p59 = scmp.eq.s32.totalorder %s58, 0
      %s61 = sadd.s32 %s60, 1
      %s62 = scalar_select %p59, %s60, %s61
      %p65 = pneg %p59
      %p66 = scmp.eq.s32.totalorder %s24, 1
      %p67 = por %p65, %p66
      %p68 = scmp.ne.s32.totalorder %s60, %s63
      %p69 = scmp.eq.s32.totalorder %s24, 0
      %p70 = por %p68, %p69
      %p71 = scmp.ne.s32.totalorder %s60, %s63
      %p72 = scmp.eq.s32.totalorder %s29, 1
      %p73 = por %p71, %p72
      %p74 = scmp.ne.s32.totalorder %s63, %s64
      %p75 = scmp.eq.s32.totalorder %s29, 0
      %p76 = por %p74, %p75
      %p77 = scmp.ne.s32.totalorder %s63, %s64
      %p78 = scmp.eq.s32.totalorder %s30, 1
      %p79 = por %p77, %p78
      %p81 = scmp.ne.s32.totalorder %s64, %s80
      %p82 = scmp.eq.s32.totalorder %s30, 0
      %p83 = por %p81, %p82
      %s85 = sadd.s32 %s84, 1
      %p88 = scmp.eq.s32.totalorder %s24, 1
      %p89 = scmp.ne.s32.totalorder %s84, %s86
      %p90 = scmp.eq.s32.totalorder %s24, 0
      %p91 = por %p89, %p90
      %p92 = scmp.ne.s32.totalorder %s84, %s86
      %p93 = scmp.eq.s32.totalorder %s29, 1
      %p94 = por %p92, %p93
      %p95 = scmp.ne.s32.totalorder %s86, %s87
      %p96 = scmp.eq.s32.totalorder %s29, 0
      %p97 = por %p95, %p96
      %p98 = scmp.ne.s32.totalorder %s86, %s87
      %p99 = scmp.eq.s32.totalorder %s30, 1
      %p100 = por %p98, %p99
      %p102 = scmp.ne.s32.totalorder %s87, %s101
      %p103 = scmp.eq.s32.totalorder %s30, 0
      %p104 = por %p102, %p103
      %s106 = sadd.s32 %s105, 1
      %p109 = scmp.eq.s32.totalorder %s24, 1
      %p110 = scmp.ne.s32.totalorder %s105, %s107
      %p111 = scmp.eq.s32.totalorder %s24, 0
      %p112 = por %p110, %p111
      %p113 = scmp.ne.s32.totalorder %s105, %s107
      %p114 = scmp.eq.s32.totalorder %s29, 1
      %p115 = por %p113, %p114
      %p116 = scmp.ne.s32.totalorder %s107, %s108
      %p117 = scmp.eq.s32.totalorder %s29, 0
      %p118 = por %p116, %p117
      %p119 = scmp.ne.s32.totalorder %s107, %s108
      %p120 = scmp.eq.s32.totalorder %s30, 1
      %p121 = por %p119, %p120
      %p123 = scmp.ne.s32.totalorder %s108, %s122
      %p124 = scmp.eq.s32.totalorder %s30, 0
      %p125 = por %p123, %p124
      %s127 = sadd.s32 %s126, 1
      %p130 = scmp.eq.s32.totalorder %s24, 1
      %p131 = scmp.ne.s32.totalorder %s126, %s128
      %p132 = scmp.eq.s32.totalorder %s24, 0
      %p133 = por %p131, %p132
      %p134 = scmp.ne.s32.totalorder %s126, %s128
      %p135 = scmp.eq.s32.totalorder %s29, 1
      %p136 = por %p134, %p135
      %p137 = scmp.ne.s32.totalorder %s128, %s129
      %p138 = scmp.eq.s32.totalorder %s29, 0
      %p139 = por %p137, %p138
      %p140 = scmp.ne.s32.totalorder %s128, %s129
      %p141 = scmp.eq.s32.totalorder %s30, 1
      %p142 = por %p140, %p141
      %p144 = scmp.ne.s32.totalorder %s129, %s143
      %p145 = scmp.eq.s32.totalorder %s30, 0
      %p146 = por %p144, %p145
      %s148 = sadd.s32 %s147, 1
      %p151 = scmp.eq.s32.totalorder %s24, 1
      %p152 = scmp.ne.s32.totalorder %s147, %s149
      %p153 = scmp.eq.s32.totalorder %s24, 0
      %p154 = por %p152, %p153
      %p155 = scmp.ne.s32.totalorder %s147, %s149
      %p156 = scmp.eq.s32.totalorder %s29, 1
      %p157 = por %p155, %p156
      %p158 = scmp.ne.s32.totalorder %s149, %s150
      %p159 = scmp.eq.s32.totalorder %s29, 0
      %p160 = por %p158, %p159
      %p161 = scmp.ne.s32.totalorder %s149, %s150
      %p162 = scmp.eq.s32.totalorder %s30, 1
      %p163 = por %p161, %p162
      %p165 = scmp.ne.s32.totalorder %s150, %s164
      %p166 = scmp.eq.s32.totalorder %s30, 0
      %p167 = por %p165, %p166
      %s169 = sadd.s32 %s168, 1
      %p172 = scmp.eq.s32.totalorder %s24, 1
      %p173 = scmp.ne.s32.totalorder %s168, %s170
      %p174 = scmp.eq.s32.totalorder %s24, 0
      %p175 = por %p173, %p174
      %p176 = scmp.ne.s32.totalorder %s168, %s170
      %p177 = scmp.eq.s32.totalorder %s29, 1
      %p178 = por %p176, %p177
      %p179 = scmp.ne.s32.totalorder %s170, %s171
      %p180 = scmp.eq.s32.totalorder %s29, 0
      %p181 = por %p179, %p180
      %p182 = scmp.ne.s32.totalorder %s170, %s171
      %p183 = scmp.eq.s32.totalorder %s30, 1
      %p184 = por %p182, %p183
      %p186 = scmp.ne.s32.totalorder %s171, %s185
      %p187 = scmp.eq.s32.totalorder %s30, 0
      %p188 = por %p186, %p187
      %s190 = sadd.s32 %s189, 1
      %p193 = scmp.eq.s32.totalorder %s24, 1
      %p194 = scmp.ne.s32.totalorder %s189, %s191
      %p195 = scmp.eq.s32.totalorder %s24, 0
      %p196 = por %p194, %p195
      %p197 = scmp.ne.s32.totalorder %s189, %s191
      %p198 = scmp.eq.s32.totalorder %s29, 1
      %p199 = por %p197, %p198
      %p200 = scmp.ne.s32.totalorder %s191, %s192
      %p201 = scmp.eq.s32.totalorder %s29, 0
      %p202 = por %p200, %p201
      %p203 = scmp.ne.s32.totalorder %s191, %s192
      %p204 = scmp.eq.s32.totalorder %s30, 1
      %p205 = por %p203, %p204
      %p207 = scmp.ne.s32.totalorder %s192, %s206
      %p208 = scmp.eq.s32.totalorder %s30, 0
      %p209 = por %p207, %p208
      %s210 = ssub.s32 %s24, %s31
      %p211 = scmp.eq.s32.totalorder %s210, 0
      %s213 = sadd.s32 %s212, 1
      %s214 = scalar_select %p211, %s212, %s213
      %p217 = pneg %p211
      %p218 = scmp.eq.s32.totalorder %s24, 1
      %p219 = por %p217, %p218
      %p220 = scmp.ne.s32.totalorder %s212, %s215
      %p221 = scmp.eq.s32.totalorder %s24, 0
      %p222 = por %p220, %p221
      %p223 = scmp.ne.s32.totalorder %s212, %s215
      %p224 = scmp.eq.s32.totalorder %s29, 1
      %p225 = por %p223, %p224
      %p226 = scmp.ne.s32.totalorder %s215, %s216
      %p227 = scmp.eq.s32.totalorder %s29, 0
      %p228 = por %p226, %p227
      %p229 = scmp.ne.s32.totalorder %s215, %s216
      %p230 = scmp.eq.s32.totalorder %s30, 1
      %p231 = por %p229, %p230
      %p233 = scmp.ne.s32.totalorder %s216, %s232
      %p234 = scmp.eq.s32.totalorder %s30, 0
      %p235 = por %p233, %p234
      %p236 = scmp.le.s32.totalorder 1, %s24
      %p237 = scmp.lt.s32.totalorder %s24, 3
      %p238 = pnand %p236, %p237
      %p239 = pneg %p238
      // Predicated region
      $region9: #{tpu_custom_call.1} parent=5 // pred_check
        _
      $region10: #{tpu_custom_call.1} parent=5 // pred_check_branch
        %241 = sbr.rel (%p238) target = $region12
      $region11: #{tpu_custom_call.1} parent=5 // pred_region
        %s242 = ssub.s32 %s24, 1
        // Predicated region
        $region13: #{tpu_custom_call.1} parent=11 // pred_check
          %p243 = pneg %p97
        $region14: #{tpu_custom_call.1} parent=11 // pred_check_branch
          %245 = sbr.rel (%p243) target = $region16
        $region15: #{tpu_custom_call.1} parent=11 // pred_region
          %s247 = ssub.s32 256, 256
          %248 = vsyncadd [#allocation6], %s247
          %s249 = sshll.u32 [#allocation7], 4
          %s250 = int_to_ptr.vmem [resolvable:$true] %s249
          %255 = dma.hbm_to_vmem [thread:$0]  %s2, 256, %s250, [#allocation6], 128, 128, 8
        $region16: #{tpu_custom_call.1} parent=11 // pred_fallthru
          _
        // Predicated region
        $region17: #{tpu_custom_call.1} parent=11 // pred_check
          %p256 = pneg %p118
        $region18: #{tpu_custom_call.1} parent=11 // pred_check_branch
          %258 = sbr.rel (%p256) target = $region20
        $region19: #{tpu_custom_call.1} parent=11 // pred_region
          _
        $region20: #{tpu_custom_call.1} parent=11 // pred_fallthru
          _
        // Predicated region
        $region21: #{tpu_custom_call.1} parent=11 // pred_check
          %p259 = pneg %p139
        $region22: #{tpu_custom_call.1} parent=11 // pred_check_branch
          %261 = sbr.rel (%p259) target = $region24
        $region23: #{tpu_custom_call.1} parent=11 // pred_region
          %s263 = ssub.s32 512, 512
          %264 = vsyncadd [#allocation9], %s263
          %s265 = sshll.u32 [#allocation8], 4
          %s266 = int_to_ptr.vmem [resolvable:$true] %s265
          %271 = dma.hbm_to_vmem [thread:$0]  %s4, 512, %s266, [#allocation9], 128, 128, 8
        $region24: #{tpu_custom_call.1} parent=11 // pred_fallthru
          _
        // Predicated region
        $region25: #{tpu_custom_call.1} parent=11 // pred_check
          %p272 = pneg %p160
        $region26: #{tpu_custom_call.1} parent=11 // pred_check_branch
          %274 = sbr.rel (%p272) target = $region28
        $region27: #{tpu_custom_call.1} parent=11 // pred_region
          _
        $region28: #{tpu_custom_call.1} parent=11 // pred_fallthru
          _
        // Predicated region
        $region29: #{tpu_custom_call.1} parent=11 // pred_check
          %p275 = pneg %p181
        $region30: #{tpu_custom_call.1} parent=11 // pred_check_branch
          %277 = sbr.rel (%p275) target = $region32
        $region31: #{tpu_custom_call.1} parent=11 // pred_region
          %s279 = ssub.s32 512, 512
          %280 = vsyncadd [#allocation9], %s279
          %s281 = sshll.u32 [#allocation10], 4
          %s282 = int_to_ptr.vmem [resolvable:$true] %s281
          %287 = dma.hbm_to_vmem [thread:$0]  %s6, 512, %s282, [#allocation9], 128, 128, 8
        $region32: #{tpu_custom_call.1} parent=11 // pred_fallthru
          _
        // Predicated region
        $region33: #{tpu_custom_call.1} parent=11 // pred_check
          %p288 = pneg %p202
        $region34: #{tpu_custom_call.1} parent=11 // pred_check_branch
          %290 = sbr.rel (%p288) target = $region36
        $region35: #{tpu_custom_call.1} parent=11 // pred_region
          _
        $region36: #{tpu_custom_call.1} parent=11 // pred_fallthru
          _
      $region12: #{tpu_custom_call.1} parent=5 // pred_fallthru
        _
      %p291 = scmp.lt.s32.totalorder %s24, 2
      // Predicated region
      $region37: #{tpu_custom_call.1} parent=5 // pred_check
        %p292 = pneg %p291
      $region38: #{tpu_custom_call.1} parent=5 // pred_check_branch
        %294 = sbr.rel (%p292) target = $region40
      $region39: #{tpu_custom_call.1} parent=5 // pred_region
        // Predicated region
        $region41: #{tpu_custom_call.1} parent=39 // pred_check
          %p295 = pneg %p44
        $region42: #{tpu_custom_call.1} parent=39 // pred_check_branch
          %297 = sbr.rel (%p295) target = $region44
        $region43: #{tpu_custom_call.1} parent=39 // pred_region
          %s298 = sand.u32 %s34, 1
          %s299 = scalar_lea.sflag [#allocation3], %s298
          %s300 = sand.u32 %s34, 1
          %s301 = smul.addr %s300, 16
          %s302 = scalar_lea.vmem [#allocation2], %s301
          %s304 = ssub.s32 256, 256
          %305 = vsyncadd %s299, %s304
          %s306 = smul.addr %s24, 2
          %s307 = smul.addr %s306, 128
          %s308 = scalar_lea.hbm %s0, %s307
          %s309 = sshll.u32 %s302, 4
          %s310 = int_to_ptr.vmem [resolvable:$true] %s309
          %315 = dma.hbm_to_vmem [thread:$0]  %s308, 256, %s310, %s299, 128, 128, 8
        $region44: #{tpu_custom_call.1} parent=39 // pred_fallthru
          _
        // Predicated region
        $region45: #{tpu_custom_call.1} parent=39 // pred_check
          %p316 = pneg %p70
        $region46: #{tpu_custom_call.1} parent=39 // pred_check_branch
          %318 = sbr.rel (%p316) target = $region48
        $region47: #{tpu_custom_call.1} parent=39 // pred_region
          %s319 = sand.u32 %s24, 1
          %s320 = scalar_lea.sflag [#allocation6], %s319
          %s321 = sand.u32 %s60, 1
          %s322 = smul.addr %s321, 16
          %s323 = scalar_lea.vmem [#allocation5], %s322
          %s325 = ssub.s32 256, 256
          %326 = vsyncadd %s320, %s325
          %s327 = smul.addr %s24, 2
          %s328 = smul.addr %s327, 128
          %s329 = scalar_lea.hbm %s1, %s328
          %s330 = sshll.u32 %s323, 4
          %s331 = int_to_ptr.vmem [resolvable:$true] %s330
          %336 = dma.hbm_to_vmem [thread:$0]  %s329, 256, %s331, %s320, 128, 128, 8
        $region48: #{tpu_custom_call.1} parent=39 // pred_fallthru
          _
      $region40: #{tpu_custom_call.1} parent=5 // pred_fallthru
        _
      %p337 = scmp.le.s32.totalorder 1, %s24
      %p338 = scmp.lt.s32.totalorder %s24, 3
      %p339 = pnand %p337, %p338
      %p340 = pneg %p339
      // Predicated region
      $region49: #{tpu_custom_call.1} parent=5 // pred_check
        _
      $region50: #{tpu_custom_call.1} parent=5 // pred_check_branch
        %342 = sbr.rel (%p339) target = $region52
      $region51: #{tpu_custom_call.1} parent=5 // pred_region
        %s343 = ssub.s32 %s24, 1
        %s344 = sand.u32 %s37, 1
        %s345 = scalar_lea.sflag [#allocation3], %s344
        %s346 = sand.u32 %s37, 1
        %s347 = smul.addr %s346, 16
        %s348 = scalar_lea.vmem [#allocation2], %s347
        // Predicated region
        $region53: #{tpu_custom_call.1} parent=51 // pred_check
          %p349 = pneg %p50
        $region54: #{tpu_custom_call.1} parent=51 // pred_check_branch
          %351 = sbr.rel (%p349) target = $region56
        $region55: #{tpu_custom_call.1} parent=51 // pred_region
          %352 = dma.done %s345, 256
        $region56: #{tpu_custom_call.1} parent=51 // pred_fallthru
          _
        %s353 = sand.u32 %s29, 1
        %s354 = scalar_lea.sflag [#allocation6], %s353
        %s355 = sand.u32 %s63, 1
        %s356 = smul.addr %s355, 16
        %s357 = scalar_lea.vmem [#allocation5], %s356
        // Predicated region
        $region57: #{tpu_custom_call.1} parent=51 // pred_check
          %p358 = pneg %p76
        $region58: #{tpu_custom_call.1} parent=51 // pred_check_branch
          %360 = sbr.rel (%p358) target = $region60
        $region59: #{tpu_custom_call.1} parent=51 // pred_region
          %361 = dma.done %s354, 256
        $region60: #{tpu_custom_call.1} parent=51 // pred_fallthru
          _
        // Predicated region
        $region61: #{tpu_custom_call.1} parent=51 // pred_check
          %p362 = pneg %p97
        $region62: #{tpu_custom_call.1} parent=51 // pred_check_branch
          %364 = sbr.rel (%p362) target = $region64
        $region63: #{tpu_custom_call.1} parent=51 // pred_region
          %365 = dma.done [#allocation6], 256
        $region64: #{tpu_custom_call.1} parent=51 // pred_fallthru
          _
        // Predicated region
        $region65: #{tpu_custom_call.1} parent=51 // pred_check
          %p366 = pneg %p139
        $region66: #{tpu_custom_call.1} parent=51 // pred_check_branch
          %368 = sbr.rel (%p366) target = $region68
        $region67: #{tpu_custom_call.1} parent=51 // pred_region
          %369 = dma.done [#allocation9], 512
        $region68: #{tpu_custom_call.1} parent=51 // pred_fallthru
          _
        // Predicated region
        $region69: #{tpu_custom_call.1} parent=51 // pred_check
          %p370 = pneg %p181
        $region70: #{tpu_custom_call.1} parent=51 // pred_check_branch
          %372 = sbr.rel (%p370) target = $region72
        $region71: #{tpu_custom_call.1} parent=51 // pred_region
          %373 = dma.done [#allocation9], 512
        $region72: #{tpu_custom_call.1} parent=51 // pred_fallthru
          _
        %s374 = sand.u32 %s37, 1
        %s375 = scalar_lea.sflag [#allocation3], %s374
        %s376 = sand.u32 %s37, 1
        %s377 = smul.addr %s376, 16
        %s378 = scalar_lea.vmem [#allocation2], %s377
        %p379 = pneg %p50
        %p380 = pneg %p47
        %s381 = sand.u32 %s29, 1
        %s382 = scalar_lea.sflag [#allocation6], %s381
        %s383 = sand.u32 %s63, 1
        %s384 = smul.addr %s383, 16
        %s385 = scalar_lea.vmem [#allocation5], %s384
        %p386 = pneg %p76
        %p387 = pneg %p73
        %p388 = pneg %p97
        %p389 = pneg %p94
        %p390 = pneg %p118
        %p391 = pneg %p115
        %p392 = pneg %p139
        %p393 = pneg %p136
        %p394 = pneg %p160
        %p395 = pneg %p157
        %p396 = pneg %p181
        %p397 = pneg %p178
        %p398 = pneg %p202
        %p399 = pneg %p199
        %p400 = pneg %p228
        %p401 = pneg %p225
        %s402 = sand.u32 %s215, 1
        %s403 = scalar_lea.sflag [#allocation4], %s402
        %s404 = sand.u32 %s215, 1
        %s405 = smul.addr %s404, 16
        %s406 = scalar_lea.vmem [#allocation11], %s405
        %v407 = vld [vmem:[%s348] sm:$0xff]
        %v408 = vld [vmem:[%s348 + $0x8] sm:$0xff]
        %v409 = vld [vmem:[%s357] sm:$0xff]
        %v410 = vld [vmem:[%s357 + $0x8] sm:$0xff]
        %v411 = vlaneseq
        %v412 = vshrl.u32 %v411, 7
        %v413 = vadd.s32 %v412, 8
        %v414 = vlaneseq
        %v415 = vand.u32 %v414, 127
        %vm416 = vcmp.eq.s32.totalorder %v412, %v415
        %vm417 = vcmp.eq.s32.totalorder %v413, %v415
        %vm418 = vcmp.eq.f32.partialorder %v407, 0.0
        %vm419 = vcmp.eq.f32.partialorder %v408, 0.0
        %vm420 = vmand %vm416, %vm418
        %vm421 = vmand %vm417, %vm419
        %v422 = vsel %vm420, 1.0, %v407
        %v423 = vsel %vm421, 1.0, %v408
        %vm424 = vcmp.eq.f32.partialorder %v409, 0.0
        %vm425 = vcmp.eq.f32.partialorder %v410, 0.0
        %vm426 = vmand %vm416, %vm424
        %vm427 = vmand %vm417, %vm425
        %v428 = vsel %vm426, 1.0, %v409
        %v429 = vsel %vm427, 1.0, %v410
        %vm430 = vcmask 130048
        %v431 = vsel %vm430, %v422, 0.0
        %v432 = vsel %vm430, %v423, 0.0
        %v433 = vadd.f32 %v431, %v432
        %v434 = vrot.slane %v433, 4
        %v435 = vadd.f32 %v433, %v434
        %v436 = vrot.slane %v435, 2
        %v437 = vadd.f32 %v435, %v436
        %v438 = vrot.slane %v437, 1
        %v439 = vadd.f32 %v437, %v438
        %v440 = vsel %vm430, %v428, 0.0
        %441 = vadd.xlane.f32.xlu0 %v440
        %v442 = vpop.xlane.xlu0 %441
        %v443 = vsel %vm430, %v429, 0.0
        %444 = vadd.xlane.f32.xlu0 %v443
        %v445 = vpop.xlane.xlu0 %444
        %vm446 = vcmp.gt.f32.partialorder %v439, 0.0
        %v447 = vrsqrt.pop %v439
        %v448 = vsel %vm446, %v447, 0.0
        %vm449 = vcmp.gt.f32.partialorder %v442, 0.0
        %vm450 = vcmp.gt.f32.partialorder %v445, 0.0
        %v451 = vrsqrt.pop %v442
        %v452 = vrsqrt.pop %v445
        %v453 = vsel %vm449, %v451, 0.0
        %v454 = vsel %vm450, %v452, 0.0
        %v455 = vmul.f32 %v428, %v453
        %v456 = vmul.f32 %v429, %v454
        %v457 = vmul.f32 %v455, %v448
        %v458 = vmul.f32 %v456, %v448
        %v459 = vld [vmem:[#allocation7] sm:$0xff]
        %v460 = vld [vmem:[#allocation7 + $0x8] sm:$0xff]
        %v462 = vsel %vm430, %v407, 0
        %v465 = vsel %vm430, %v408, 0
        %467 = vmatprep.subr.mxu0 0.0
        %468 = vmatpush1.msra.mxu0 0.0
        %469 = vmatprep.subr.mxu0 0.0
        %470 = vmatpush1.msra.mxu0 0.0
        %471 = vmatprep.subr.mxu0 0.0
        %472 = vmatpush1.msra.mxu0 0.0
        %473 = vmatprep.subr.mxu0 0.0
        %474 = vmatpush1.msra.mxu0 0.0
        %475 = vmatprep.subr.mxu0 0.0
        %476 = vmatpush1.msra.mxu0 0.0
        %477 = vmatprep.subr.mxu0 0.0
        %478 = vmatpush1.msra.mxu0 0.0
        %479 = vmatprep.subr.mxu0 0.0
        %480 = vmatpush1.msra.mxu0 0.0
        %481 = vmatprep.subr.mxu0 0.0
        %482 = vmatpush1.msra.mxu0 0.0
        %483 = vmatprep.subr.mxu0 0.0
        %484 = vmatpush1.msra.mxu0 0.0
        %485 = vmatprep.subr.mxu0 0.0
        %486 = vmatpush1.msra.mxu0 0.0
        %487 = vmatprep.subr.mxu0 0.0
        %488 = vmatpush1.msra.mxu0 0.0
        %489 = vmatprep.subr.mxu0 0.0
        %490 = vmatpush1.msra.mxu0 0.0
        %491 = vmatprep.subr.mxu0 0.0
        %492 = vmatpush1.msra.mxu0 0.0
        %493 = vmatprep.subr.mxu0 0.0
        %494 = vmatpush1.msra.mxu0 0.0
        %495 = vmatprep.subr.mxu0 0.0
        %496 = vmatpush1.msra.mxu0 %v460
        %497 = vmatprep.subr.mxu0 0.0
        %498 = vmatpush1.msra.mxu0 %v459
        %499 = vmatprep.subr.mxu0 0.0
        %500 = vmatpush2.msra.mxu0 0.0
        %501 = vmatprep.subr.mxu0 0.0
        %502 = vmatpush2.msra.mxu0 0.0
        %503 = vmatprep.subr.mxu0 0.0
        %504 = vmatpush2.msra.mxu0 0.0
        %505 = vmatprep.subr.mxu0 0.0
        %506 = vmatpush2.msra.mxu0 0.0
        %507 = vmatprep.subr.mxu0 0.0
        %508 = vmatpush2.msra.mxu0 0.0
        %509 = vmatprep.subr.mxu0 0.0
        %510 = vmatpush2.msra.mxu0 0.0
        %511 = vmatprep.subr.mxu0 0.0
        %512 = vmatpush2.msra.mxu0 0.0
        %513 = vmatprep.subr.mxu0 0.0
        %514 = vmatpush2.msra.mxu0 0.0
        %515 = vmatprep.subr.mxu0 0.0
        %516 = vmatpush2.msra.mxu0 0.0
        %517 = vmatprep.subr.mxu0 0.0
        %518 = vmatpush2.msra.mxu0 0.0
        %519 = vmatprep.subr.mxu0 0.0
        %520 = vmatpush2.msra.mxu0 0.0
        %521 = vmatprep.subr.mxu0 0.0
        %522 = vmatpush2.msra.mxu0 0.0
        %523 = vmatprep.subr.mxu0 0.0
        %524 = vmatpush2.msra.mxu0 0.0
        %525 = vmatprep.subr.mxu0 0.0
        %526 = vmatpush2.msra.mxu0 0.0
        %527 = vmatprep.subr.mxu0 0.0
        %528 = vmatpush2.msra.mxu0 0.0
        %529 = vmatprep.subr.mxu0 0.0
        %530 = vmatpush2.msra.mxu0 0.0
        %531 = vmatprep.mubr.f32.mxu0 0.0
        %532 = vmatmul.mubr.f32.gmra.mxu0 %v462
        %v533 = vpop.f32.mrf.mxu0
        %v534 = vadd.f32 0.0, %v533
        %v535 = vpop.f32.mrf.mxu0
        %536 = vmatprep.mubr.f32.mxu0 0.0
        %537 = vmatmul.mubr.f32.gmra.mxu0 %v465
        %v538 = vpop.f32.mrf.mxu0
        %v539 = vadd.f32 0.0, %v538
        %v540 = vpop.f32.mrf.mxu0
        %541 = vdwg.mxu0
        %v542 = vld [vmem:[%s3] sm:$0x1]
        %v544 = vlaneseq
        %v545 = vshrl.u32 %v544, 7
        %v546 = vsub.s32 0, %v545
        %v547 = vrot.slane %v542, %v546
        %v550 = vsel %vm430, %v457, 0
        %v553 = vsel %vm430, %v458, 0
        %555 = vmatprep.subr.mxu0 0.0
        %556 = vmatpush1.msra.mxu0 0.0
        %557 = vmatprep.subr.mxu0 0.0
        %558 = vmatpush1.msra.mxu0 0.0
        %559 = vmatprep.subr.mxu0 0.0
        %560 = vmatpush1.msra.mxu0 0.0
        %561 = vmatprep.subr.mxu0 0.0
        %562 = vmatpush1.msra.mxu0 0.0
        %563 = vmatprep.subr.mxu0 0.0
        %564 = vmatpush1.msra.mxu0 0.0
        %565 = vmatprep.subr.mxu0 0.0
        %566 = vmatpush1.msra.mxu0 0.0
        %567 = vmatprep.subr.mxu0 0.0
        %568 = vmatpush1.msra.mxu0 0.0
        %569 = vmatprep.subr.mxu0 0.0
        %570 = vmatpush1.msra.mxu0 0.0
        %571 = vmatprep.subr.mxu0 0.0
        %572 = vmatpush1.msra.mxu0 0.0
        %573 = vmatprep.subr.mxu0 0.0
        %574 = vmatpush1.msra.mxu0 0.0
        %575 = vmatprep.subr.mxu0 0.0
        %576 = vmatpush1.msra.mxu0 0.0
        %577 = vmatprep.subr.mxu0 0.0
        %578 = vmatpush1.msra.mxu0 0.0
        %579 = vmatprep.subr.mxu0 0.0
        %580 = vmatpush1.msra.mxu0 0.0
        %581 = vmatprep.subr.mxu0 0.0
        %582 = vmatpush1.msra.mxu0 0.0
        %583 = vmatprep.subr.mxu0 0.0
        %584 = vmatpush1.msra.mxu0 %v539
        %585 = vmatprep.subr.mxu0 0.0
        %586 = vmatpush1.msra.mxu0 %v534
        %587 = vmatprep.subr.mxu0 0.0
        %588 = vmatpush2.msra.mxu0 0.0
        %589 = vmatprep.subr.mxu0 0.0
        %590 = vmatpush2.msra.mxu0 0.0
        %591 = vmatprep.subr.mxu0 0.0
        %592 = vmatpush2.msra.mxu0 0.0
        %593 = vmatprep.subr.mxu0 0.0
        %594 = vmatpush2.msra.mxu0 0.0
        %595 = vmatprep.subr.mxu0 0.0
        %596 = vmatpush2.msra.mxu0 0.0
        %597 = vmatprep.subr.mxu0 0.0
        %598 = vmatpush2.msra.mxu0 0.0
        %599 = vmatprep.subr.mxu0 0.0
        %600 = vmatpush2.msra.mxu0 0.0
        %601 = vmatprep.subr.mxu0 0.0
        %602 = vmatpush2.msra.mxu0 0.0
        %603 = vmatprep.subr.mxu0 0.0
        %604 = vmatpush2.msra.mxu0 0.0
        %605 = vmatprep.subr.mxu0 0.0
        %606 = vmatpush2.msra.mxu0 0.0
        %607 = vmatprep.subr.mxu0 0.0
        %608 = vmatpush2.msra.mxu0 0.0
        %609 = vmatprep.subr.mxu0 0.0
        %610 = vmatpush2.msra.mxu0 0.0
        %611 = vmatprep.subr.mxu0 0.0
        %612 = vmatpush2.msra.mxu0 0.0
        %613 = vmatprep.subr.mxu0 0.0
        %614 = vmatpush2.msra.mxu0 0.0
        %615 = vmatprep.subr.mxu0 0.0
        %616 = vmatpush2.msra.mxu0 0.0
        %617 = vmatprep.subr.mxu0 0.0
        %618 = vmatpush2.msra.mxu0 0.0
        %619 = vmatprep.mubr.f32.mxu0 0.0
        %620 = vmatmul.mubr.f32.gmra.mxu0 %v550
        %v621 = vpop.f32.mrf.mxu0
        %v622 = vadd.f32 %v547, %v621
        %v623 = vpop.f32.mrf.mxu0
        %624 = vmatprep.mubr.f32.mxu0 0.0
        %625 = vmatmul.mubr.f32.gmra.mxu0 %v553
        %v626 = vpop.f32.mrf.mxu0
        %v627 = vadd.f32 %v547, %v626
        %v628 = vpop.f32.mrf.mxu0
        %629 = vdwg.mxu0
        %v630 = vld [vmem:[#allocation8] sm:$0xff]
        %v631 = vld [vmem:[#allocation8 + $0x8] sm:$0xff]
        %v632 = vld [vmem:[#allocation8 + $0x10] sm:$0xff]
        %v633 = vld [vmem:[#allocation8 + $0x18] sm:$0xff]
        %vm634 = vcmask 261120
        %v636 = vsel %vm634, %v622, 0
        %v639 = vsel %vm634, %v627, 0
        %641 = vmatprep.subr.mxu0 0.0
        %642 = vmatpush1.msra.mxu0 0.0
        %643 = vmatprep.subr.mxu0 0.0
        %644 = vmatpush1.msra.mxu0 0.0
        %645 = vmatprep.subr.mxu0 0.0
        %646 = vmatpush1.msra.mxu0 0.0
        %647 = vmatprep.subr.mxu0 0.0
        %648 = vmatpush1.msra.mxu0 0.0
        %649 = vmatprep.subr.mxu0 0.0
        %650 = vmatpush1.msra.mxu0 0.0
        %651 = vmatprep.subr.mxu0 0.0
        %652 = vmatpush1.msra.mxu0 0.0
        %653 = vmatprep.subr.mxu0 0.0
        %654 = vmatpush1.msra.mxu0 0.0
        %655 = vmatprep.subr.mxu0 0.0
        %656 = vmatpush1.msra.mxu0 0.0
        %657 = vmatprep.subr.mxu0 0.0
        %658 = vmatpush1.msra.mxu0 0.0
        %659 = vmatprep.subr.mxu0 0.0
        %660 = vmatpush1.msra.mxu0 0.0
        %661 = vmatprep.subr.mxu0 0.0
        %662 = vmatpush1.msra.mxu0 0.0
        %663 = vmatprep.subr.mxu0 0.0
        %664 = vmatpush1.msra.mxu0 0.0
        %665 = vmatprep.subr.mxu0 0.0
        %666 = vmatpush1.msra.mxu0 %v633
        %667 = vmatprep.subr.mxu0 0.0
        %668 = vmatpush1.msra.mxu0 %v632
        %669 = vmatprep.subr.mxu0 0.0
        %670 = vmatpush1.msra.mxu0 %v631
        %671 = vmatprep.subr.mxu0 0.0
        %672 = vmatpush1.msra.mxu0 %v630
        %673 = vmatprep.subr.mxu0 0.0
        %674 = vmatpush2.msra.mxu0 0.0
        %675 = vmatprep.subr.mxu0 0.0
        %676 = vmatpush2.msra.mxu0 0.0
        %677 = vmatprep.subr.mxu0 0.0
        %678 = vmatpush2.msra.mxu0 0.0
        %679 = vmatprep.subr.mxu0 0.0
        %680 = vmatpush2.msra.mxu0 0.0
        %681 = vmatprep.subr.mxu0 0.0
        %682 = vmatpush2.msra.mxu0 0.0
        %683 = vmatprep.subr.mxu0 0.0
        %684 = vmatpush2.msra.mxu0 0.0
        %685 = vmatprep.subr.mxu0 0.0
        %686 = vmatpush2.msra.mxu0 0.0
        %687 = vmatprep.subr.mxu0 0.0
        %688 = vmatpush2.msra.mxu0 0.0
        %689 = vmatprep.subr.mxu0 0.0
        %690 = vmatpush2.msra.mxu0 0.0
        %691 = vmatprep.subr.mxu0 0.0
        %692 = vmatpush2.msra.mxu0 0.0
        %693 = vmatprep.subr.mxu0 0.0
        %694 = vmatpush2.msra.mxu0 0.0
        %695 = vmatprep.subr.mxu0 0.0
        %696 = vmatpush2.msra.mxu0 0.0
        %697 = vmatprep.subr.mxu0 0.0
        %698 = vmatpush2.msra.mxu0 0.0
        %699 = vmatprep.subr.mxu0 0.0
        %700 = vmatpush2.msra.mxu0 0.0
        %701 = vmatprep.subr.mxu0 0.0
        %702 = vmatpush2.msra.mxu0 0.0
        %703 = vmatprep.subr.mxu0 0.0
        %704 = vmatpush2.msra.mxu0 0.0
        %705 = vmatprep.mubr.f32.mxu0 0.0
        %706 = vmatmul.mubr.f32.gmra.mxu0 %v636
        %v707 = vpop.f32.mrf.mxu0
        %v708 = vadd.f32 0.0, %v707
        %v709 = vpop.f32.mrf.mxu0
        %710 = vmatprep.mubr.f32.mxu0 0.0
        %711 = vmatmul.mubr.f32.gmra.mxu0 %v639
        %v712 = vpop.f32.mrf.mxu0
        %v713 = vadd.f32 0.0, %v712
        %v714 = vpop.f32.mrf.mxu0
        %715 = vdwg.mxu0
        %v716 = vld [vmem:[%s5] sm:$0x1]
        %v718 = vlaneseq
        %v719 = vshrl.u32 %v718, 7
        %v720 = vsub.s32 0, %v719
        %v721 = vrot.slane %v716, %v720
        %723 = vmatprep.subr.mxu0 0.0
        %724 = vmatpush1.msra.mxu0 0.0
        %725 = vmatprep.subr.mxu0 0.0
        %726 = vmatpush1.msra.mxu0 0.0
        %727 = vmatprep.subr.mxu0 0.0
        %728 = vmatpush1.msra.mxu0 0.0
        %729 = vmatprep.subr.mxu0 0.0
        %730 = vmatpush1.msra.mxu0 0.0
        %731 = vmatprep.subr.mxu0 0.0
        %732 = vmatpush1.msra.mxu0 0.0
        %733 = vmatprep.subr.mxu0 0.0
        %734 = vmatpush1.msra.mxu0 0.0
        %735 = vmatprep.subr.mxu0 0.0
        %736 = vmatpush1.msra.mxu0 0.0
        %737 = vmatprep.subr.mxu0 0.0
        %738 = vmatpush1.msra.mxu0 0.0
        %739 = vmatprep.subr.mxu0 0.0
        %740 = vmatpush1.msra.mxu0 0.0
        %741 = vmatprep.subr.mxu0 0.0
        %742 = vmatpush1.msra.mxu0 0.0
        %743 = vmatprep.subr.mxu0 0.0
        %744 = vmatpush1.msra.mxu0 0.0
        %745 = vmatprep.subr.mxu0 0.0
        %746 = vmatpush1.msra.mxu0 0.0
        %747 = vmatprep.subr.mxu0 0.0
        %748 = vmatpush1.msra.mxu0 0.0
        %749 = vmatprep.subr.mxu0 0.0
        %750 = vmatpush1.msra.mxu0 0.0
        %751 = vmatprep.subr.mxu0 0.0
        %752 = vmatpush1.msra.mxu0 %v713
        %753 = vmatprep.subr.mxu0 0.0
        %754 = vmatpush1.msra.mxu0 %v708
        %755 = vmatprep.subr.mxu0 0.0
        %756 = vmatpush2.msra.mxu0 0.0
        %757 = vmatprep.subr.mxu0 0.0
        %758 = vmatpush2.msra.mxu0 0.0
        %759 = vmatprep.subr.mxu0 0.0
        %760 = vmatpush2.msra.mxu0 0.0
        %761 = vmatprep.subr.mxu0 0.0
        %762 = vmatpush2.msra.mxu0 0.0
        %763 = vmatprep.subr.mxu0 0.0
        %764 = vmatpush2.msra.mxu0 0.0
        %765 = vmatprep.subr.mxu0 0.0
        %766 = vmatpush2.msra.mxu0 0.0
        %767 = vmatprep.subr.mxu0 0.0
        %768 = vmatpush2.msra.mxu0 0.0
        %769 = vmatprep.subr.mxu0 0.0
        %770 = vmatpush2.msra.mxu0 0.0
        %771 = vmatprep.subr.mxu0 0.0
        %772 = vmatpush2.msra.mxu0 0.0
        %773 = vmatprep.subr.mxu0 0.0
        %774 = vmatpush2.msra.mxu0 0.0
        %775 = vmatprep.subr.mxu0 0.0
        %776 = vmatpush2.msra.mxu0 0.0
        %777 = vmatprep.subr.mxu0 0.0
        %778 = vmatpush2.msra.mxu0 0.0
        %779 = vmatprep.subr.mxu0 0.0
        %780 = vmatpush2.msra.mxu0 0.0
        %781 = vmatprep.subr.mxu0 0.0
        %782 = vmatpush2.msra.mxu0 0.0
        %783 = vmatprep.subr.mxu0 0.0
        %784 = vmatpush2.msra.mxu0 0.0
        %785 = vmatprep.subr.mxu0 0.0
        %786 = vmatpush2.msra.mxu0 0.0
        %787 = vmatprep.mubr.f32.mxu0 0.0
        %788 = vmatmul.mubr.f32.gmra.mxu0 %v550
        %v789 = vpop.f32.mrf.mxu0
        %v790 = vadd.f32 %v721, %v789
        %v791 = vpop.f32.mrf.mxu0
        %792 = vmatprep.mubr.f32.mxu0 0.0
        %793 = vmatmul.mubr.f32.gmra.mxu0 %v553
        %v794 = vpop.f32.mrf.mxu0
        %v795 = vadd.f32 %v721, %v794
        %v796 = vpop.f32.mrf.mxu0
        %797 = vdwg.mxu0
        %v798 = vld [vmem:[#allocation10] sm:$0xff]
        %v799 = vld [vmem:[#allocation10 + $0x8] sm:$0xff]
        %v800 = vld [vmem:[#allocation10 + $0x10] sm:$0xff]
        %v801 = vld [vmem:[#allocation10 + $0x18] sm:$0xff]
        %v803 = vsel %vm634, %v790, 0
        %v806 = vsel %vm634, %v795, 0
        %808 = vmatprep.subr.mxu0 0.0
        %809 = vmatpush1.msra.mxu0 0.0
        %810 = vmatprep.subr.mxu0 0.0
        %811 = vmatpush1.msra.mxu0 0.0
        %812 = vmatprep.subr.mxu0 0.0
        %813 = vmatpush1.msra.mxu0 0.0
        %814 = vmatprep.subr.mxu0 0.0
        %815 = vmatpush1.msra.mxu0 0.0
        %816 = vmatprep.subr.mxu0 0.0
        %817 = vmatpush1.msra.mxu0 0.0
        %818 = vmatprep.subr.mxu0 0.0
        %819 = vmatpush1.msra.mxu0 0.0
        %820 = vmatprep.subr.mxu0 0.0
        %821 = vmatpush1.msra.mxu0 0.0
        %822 = vmatprep.subr.mxu0 0.0
        %823 = vmatpush1.msra.mxu0 0.0
        %824 = vmatprep.subr.mxu0 0.0
        %825 = vmatpush1.msra.mxu0 0.0
        %826 = vmatprep.subr.mxu0 0.0
        %827 = vmatpush1.msra.mxu0 0.0
        %828 = vmatprep.subr.mxu0 0.0
        %829 = vmatpush1.msra.mxu0 0.0
        %830 = vmatprep.subr.mxu0 0.0
        %831 = vmatpush1.msra.mxu0 0.0
        %832 = vmatprep.subr.mxu0 0.0
        %833 = vmatpush1.msra.mxu0 %v801
        %834 = vmatprep.subr.mxu0 0.0
        %835 = vmatpush1.msra.mxu0 %v800
        %836 = vmatprep.subr.mxu0 0.0
        %837 = vmatpush1.msra.mxu0 %v799
        %838 = vmatprep.subr.mxu0 0.0
        %839 = vmatpush1.msra.mxu0 %v798
        %840 = vmatprep.subr.mxu0 0.0
        %841 = vmatpush2.msra.mxu0 0.0
        %842 = vmatprep.subr.mxu0 0.0
        %843 = vmatpush2.msra.mxu0 0.0
        %844 = vmatprep.subr.mxu0 0.0
        %845 = vmatpush2.msra.mxu0 0.0
        %846 = vmatprep.subr.mxu0 0.0
        %847 = vmatpush2.msra.mxu0 0.0
        %848 = vmatprep.subr.mxu0 0.0
        %849 = vmatpush2.msra.mxu0 0.0
        %850 = vmatprep.subr.mxu0 0.0
        %851 = vmatpush2.msra.mxu0 0.0
        %852 = vmatprep.subr.mxu0 0.0
        %853 = vmatpush2.msra.mxu0 0.0
        %854 = vmatprep.subr.mxu0 0.0
        %855 = vmatpush2.msra.mxu0 0.0
        %856 = vmatprep.subr.mxu0 0.0
        %857 = vmatpush2.msra.mxu0 0.0
        %858 = vmatprep.subr.mxu0 0.0
        %859 = vmatpush2.msra.mxu0 0.0
        %860 = vmatprep.subr.mxu0 0.0
        %861 = vmatpush2.msra.mxu0 0.0
        %862 = vmatprep.subr.mxu0 0.0
        %863 = vmatpush2.msra.mxu0 0.0
        %864 = vmatprep.subr.mxu0 0.0
        %865 = vmatpush2.msra.mxu0 0.0
        %866 = vmatprep.subr.mxu0 0.0
        %867 = vmatpush2.msra.mxu0 0.0
        %868 = vmatprep.subr.mxu0 0.0
        %869 = vmatpush2.msra.mxu0 0.0
        %870 = vmatprep.subr.mxu0 0.0
        %871 = vmatpush2.msra.mxu0 0.0
        %872 = vmatprep.mubr.f32.mxu0 0.0
        %873 = vmatmul.mubr.f32.gmra.mxu0 %v803
        %v874 = vpop.f32.mrf.mxu0
        %v875 = vadd.f32 0.0, %v874
        %v876 = vpop.f32.mrf.mxu0
        %877 = vmatprep.mubr.f32.mxu0 0.0
        %878 = vmatmul.mubr.f32.gmra.mxu0 %v806
        %v879 = vpop.f32.mrf.mxu0
        %v880 = vadd.f32 0.0, %v879
        %v881 = vpop.f32.mrf.mxu0
        %882 = vdwg.mxu0
        %v883 = vld [vmem:[%s7] sm:$0x1]
        %v885 = vlaneseq
        %v886 = vshrl.u32 %v885, 7
        %v887 = vsub.s32 0, %v886
        %v888 = vrot.slane %v883, %v887
        %890 = vmatprep.subr.mxu0 0.0
        %891 = vmatpush1.msra.mxu0 0.0
        %892 = vmatprep.subr.mxu0 0.0
        %893 = vmatpush1.msra.mxu0 0.0
        %894 = vmatprep.subr.mxu0 0.0
        %895 = vmatpush1.msra.mxu0 0.0
        %896 = vmatprep.subr.mxu0 0.0
        %897 = vmatpush1.msra.mxu0 0.0
        %898 = vmatprep.subr.mxu0 0.0
        %899 = vmatpush1.msra.mxu0 0.0
        %900 = vmatprep.subr.mxu0 0.0
        %901 = vmatpush1.msra.mxu0 0.0
        %902 = vmatprep.subr.mxu0 0.0
        %903 = vmatpush1.msra.mxu0 0.0
        %904 = vmatprep.subr.mxu0 0.0
        %905 = vmatpush1.msra.mxu0 0.0
        %906 = vmatprep.subr.mxu0 0.0
        %907 = vmatpush1.msra.mxu0 0.0
        %908 = vmatprep.subr.mxu0 0.0
        %909 = vmatpush1.msra.mxu0 0.0
        %910 = vmatprep.subr.mxu0 0.0
        %911 = vmatpush1.msra.mxu0 0.0
        %912 = vmatprep.subr.mxu0 0.0
        %913 = vmatpush1.msra.mxu0 0.0
        %914 = vmatprep.subr.mxu0 0.0
        %915 = vmatpush1.msra.mxu0 0.0
        %916 = vmatprep.subr.mxu0 0.0
        %917 = vmatpush1.msra.mxu0 0.0
        %918 = vmatprep.subr.mxu0 0.0
        %919 = vmatpush1.msra.mxu0 %v880
        %920 = vmatprep.subr.mxu0 0.0
        %921 = vmatpush1.msra.mxu0 %v875
        %922 = vmatprep.subr.mxu0 0.0
        %923 = vmatpush2.msra.mxu0 0.0
        %924 = vmatprep.subr.mxu0 0.0
        %925 = vmatpush2.msra.mxu0 0.0
        %926 = vmatprep.subr.mxu0 0.0
        %927 = vmatpush2.msra.mxu0 0.0
        %928 = vmatprep.subr.mxu0 0.0
        %929 = vmatpush2.msra.mxu0 0.0
        %930 = vmatprep.subr.mxu0 0.0
        %931 = vmatpush2.msra.mxu0 0.0
        %932 = vmatprep.subr.mxu0 0.0
        %933 = vmatpush2.msra.mxu0 0.0
        %934 = vmatprep.subr.mxu0 0.0
        %935 = vmatpush2.msra.mxu0 0.0
        %936 = vmatprep.subr.mxu0 0.0
        %937 = vmatpush2.msra.mxu0 0.0
        %938 = vmatprep.subr.mxu0 0.0
        %939 = vmatpush2.msra.mxu0 0.0
        %940 = vmatprep.subr.mxu0 0.0
        %941 = vmatpush2.msra.mxu0 0.0
        %942 = vmatprep.subr.mxu0 0.0
        %943 = vmatpush2.msra.mxu0 0.0
        %944 = vmatprep.subr.mxu0 0.0
        %945 = vmatpush2.msra.mxu0 0.0
        %946 = vmatprep.subr.mxu0 0.0
        %947 = vmatpush2.msra.mxu0 0.0
        %948 = vmatprep.subr.mxu0 0.0
        %949 = vmatpush2.msra.mxu0 0.0
        %950 = vmatprep.subr.mxu0 0.0
        %951 = vmatpush2.msra.mxu0 0.0
        %952 = vmatprep.subr.mxu0 0.0
        %953 = vmatpush2.msra.mxu0 0.0
        %954 = vmatprep.mubr.f32.mxu0 0.0
        %955 = vmatmul.mubr.f32.gmra.mxu0 %v550
        %v956 = vpop.f32.mrf.mxu0
        %v957 = vadd.f32 %v888, %v956
        %v958 = vpop.f32.mrf.mxu0
        %959 = vmatprep.mubr.f32.mxu0 0.0
        %960 = vmatmul.mubr.f32.gmra.mxu0 %v553
        %v961 = vpop.f32.mrf.mxu0
        %v962 = vadd.f32 %v888, %v961
        %v963 = vpop.f32.mrf.mxu0
        %964 = vdwg.mxu0
        %965 = vst.msk [vmem:[%s406] sm:$0xff] %vm634, %v957
        %966 = vst.msk [vmem:[%s406 + $0x8] sm:$0xff] %vm634, %v962
        %s967 = sand.u32 %s215, 1
        %s968 = scalar_lea.sflag [#allocation4], %s967
        %s969 = sand.u32 %s215, 1
        %s970 = smul.addr %s969, 16
        %s971 = scalar_lea.vmem [#allocation11], %s970
        // Predicated region
        $region73: #{tpu_custom_call.1} parent=51 // pred_check
          %p972 = pneg %p225
        $region74: #{tpu_custom_call.1} parent=51 // pred_check_branch
          %974 = sbr.rel (%p972) target = $region76
        $region75: #{tpu_custom_call.1} parent=51 // pred_region
          %s976 = ssub.s32 256, 256
          %977 = vsyncadd %s968, %s976
          %s978 = smul.addr %s29, 2
          %s979 = smul.addr %s978, 128
          %s980 = scalar_lea.hbm %s8, %s979
          %s981 = sshll.u32 %s971, 4
          %s982 = int_to_ptr.vmem [resolvable:$true] %s981
          %987 = dma.vmem_to_hbm [thread:$0]  %s982, 256, %s980, %s968, 128, 128, 8
        $region76: #{tpu_custom_call.1} parent=51 // pred_fallthru
          _
      $region52: #{tpu_custom_call.1} parent=5 // pred_fallthru
        _
      %p988 = scmp.le.s32.totalorder 2, %s24
      // Predicated region
      $region77: #{tpu_custom_call.1} parent=5 // pred_check
        %p989 = pneg %p988
      $region78: #{tpu_custom_call.1} parent=5 // pred_check_branch
        %991 = sbr.rel (%p989) target = $region80
      $region79: #{tpu_custom_call.1} parent=5 // pred_region
        %s992 = ssub.s32 %s24, 2
        // Predicated region
        $region81: #{tpu_custom_call.1} parent=79 // pred_check
          %p993 = pneg %p231
        $region82: #{tpu_custom_call.1} parent=79 // pred_check_branch
          %995 = sbr.rel (%p993) target = $region84
        $region83: #{tpu_custom_call.1} parent=79 // pred_region
          %s996 = sand.u32 %s216, 1
          %s997 = scalar_lea.sflag [#allocation4], %s996
          %s998 = sand.u32 %s216, 1
          %s999 = smul.addr %s998, 16
          %s1000 = scalar_lea.vmem [#allocation11], %s999
          %1001 = dma.done %s997, 256
        $region84: #{tpu_custom_call.1} parent=79 // pred_fallthru
          _
      $region80: #{tpu_custom_call.1} parent=5 // pred_fallthru
        _
    $region6: #{tpu_custom_call.1} parent=1 // loop_footer
      %s28 = sadd.s32 1, %s24
    $region7: #{tpu_custom_call.1} parent=1 // loop_footer_branch
      %23 = sbr.rel target = $region3
    $region8: #{tpu_custom_call.1} parent=1 // loop_exit
      _
    %1002 = vsyncpa [#allocation3], 1
    %s1003 = scalar_lea.sflag [#allocation3], 1
    %1004 = vsyncpa %s1003, 1
    %1005 = vsyncpa [#allocation6], 1
    %s1006 = scalar_lea.sflag [#allocation6], 1
    %1007 = vsyncpa %s1006, 1
    %1008 = vsyncpa [#allocation9], 1
    %1009 = vsyncpa [#allocation4], 1
    %s1010 = scalar_lea.sflag [#allocation4], 1
    %1011 = vsyncpa %s1010, 1

</llo_original>
